<compile_context>
chip_gen: v7x
topology: tpu7x:2x2x1
jax: 0.10.0
libtpu: 0.0.40
codegen_flags: <defaults>
</compile_context>

<pallas_src>
import jax
import jax.numpy as jnp
from jax.experimental import pallas as pl
from jax.experimental.pallas import tpu as pltpu


LANE_W = 512                       # lane-dense last dim (multiple of 128)
TARGET_BLOCK_BYTES = 4 << 20       # ~4 MiB per block (dtype-scaled rows)
VMEM_LIMIT_BYTES = 32 << 20        # 2 bufs x (in+out) x 4 MiB = 16 MiB < 32 MiB
SMALL_N = 64 * 1024                # below this, skip Pallas entirely


def _sigmoid_kernel(x_ref, o_ref):
    # Upcast inside the kernel (v5e has no bf16 VPU/EUP paths); single tanh
    # on the EUP; cast back to the native dtype for the store.
    x = x_ref[...].astype(jnp.float32)
    y = 0.5 * (jnp.tanh(0.5 * x) + 1.0)
    o_ref[...] = y.astype(o_ref.dtype)


def _round_up(v, m):
    return ((v + m - 1) // m) * m


def _sigmoid_slab(x2d):
    """Sigmoid over a lane-dense (rows, LANE_W) slab via pallas_call."""
    rows, _ = x2d.shape
    itemsize = jnp.dtype(x2d.dtype).itemsize
    n_elems = rows * LANE_W

    # Dtype-scaled block: ~TARGET_BLOCK_BYTES per block, rows multiple of 8.
    max_tile_r = max(8, (TARGET_BLOCK_BYTES // (LANE_W * itemsize)) // 8 * 8)
    # At least 2 grid steps so the "parallel" axis shards across both
    # TensorCores on v7x (no effect on single-TC v5e/v6e).
    tile_r = min(max_tile_r, _round_up(pl.cdiv(rows, 2), 8))
    grid = (pl.cdiv(rows, tile_r),)

    return pl.pallas_call(
        _sigmoid_kernel,
        out_shape=jax.ShapeDtypeStruct((rows, LANE_W), x2d.dtype),
        grid_spec=pl.GridSpec(
            grid=grid,
            in_specs=[pl.BlockSpec((tile_r, LANE_W), lambda i: (i, 0))],
            out_specs=pl.BlockSpec((tile_r, LANE_W), lambda i: (i, 0)),
        ),
        compiler_params=pltpu.CompilerParams(
            dimension_semantics=("parallel",),
            vmem_limit_bytes=VMEM_LIMIT_BYTES,
        ),
        cost_estimate=pl.CostEstimate(
            flops=2 * n_elems,
            transcendentals=n_elems,
            bytes_accessed=2 * n_elems * itemsize,
        ),
    )(x2d)


def austin_forward(x):
    """Elementwise sigmoid of x (any shape) -- forward() of module Austin."""
    # TODO(synk): integer input dtypes are not handled (module contract is float).
    orig_shape = x.shape
    n = x.size

    # Tiny-input fast path: pallas_call setup + one grid step costs more than
    # the work; XLA's fused elementwise is strictly faster here.
    if n < SMALL_N:
        return jax.nn.sigmoid(x)

    x_flat = jnp.ravel(x)
    rows = n // LANE_W
    n_main = rows * LANE_W
    tail = n - n_main

    if tail == 0:
        # Perfectly aligned: zero wrapper copies beyond the (free) reshape.
        out2d = _sigmoid_slab(x_flat.reshape(rows, LANE_W))
        return out2d.reshape(orig_shape)

    # Unaligned: kernel on the aligned prefix (no padded full-array copy),
    # plain XLA sigmoid on the <LANE_W element tail, then stitch.
    main_out = _sigmoid_slab(x_flat[:n_main].reshape(rows, LANE_W))
    tail_out = jax.nn.sigmoid(x_flat[n_main:])
    out_flat = jnp.concatenate([main_out.reshape(-1), tail_out])
    return out_flat.reshape(orig_shape)


if __name__ == "__main__":
    key = jax.random.PRNGKey(0)
    forward = jax.jit(austin_forward)

    # Shape consistent with the reference script's reshape(-1, 1, 2, 2), large
    # enough to exercise the Pallas kernel AND the unaligned-tail path
    # (16385 * 4 = 65540 elements; 65540 % 512 == 4).
    x_big = jax.random.normal(key, (16385, 1, 2, 2), dtype=jnp.float32)
    y_big = forward(x_big)
    jax.block_until_ready(y_big)
    assert y_big.shape == x_big.shape and y_big.dtype == x_big.dtype
    assert jnp.allclose(y_big, jax.nn.sigmoid(x_big), atol=1e-6), \
        "mismatch vs reference sigmoid (kernel path)"

    # Tiny demo shape like the original script -> small-input fast path.
    x_small = jax.random.normal(key, (8, 1, 2, 2), dtype=jnp.float32)
    y_small = forward(x_small)
    jax.block_until_ready(y_small)
    assert y_small.shape == x_small.shape and y_small.dtype == x_small.dtype
    assert jnp.allclose(y_small, jax.nn.sigmoid(x_small), atol=1e-6), \
        "mismatch vs reference sigmoid (fast path)"

    print("KERNEL_OK")
</pallas_src>

<mosaic_0001>
module attributes {stable_mosaic.version = 11 : i64} {
  func.func @_sigmoid_kernel(%arg0: i32, %arg1: memref<64x512xf32, #tpu.memory_space<vmem>>, %arg2: memref<64x512xf32, #tpu.memory_space<vmem>>) attributes {dimension_semantics = [#tpu.dimension_semantics<parallel>], iteration_bounds = array<i64: 2>, scalar_prefetch = 0 : i64, scratch_operands = 0 : i64, tpu.core_type = #tpu.core_type<tc>, window_params = [{transform_indices = @transform_0, window_bounds = array<i64: 64, 512>}, {transform_indices = @transform_1, window_bounds = array<i64: 64, 512>}]} {
    %c0 = arith.constant 0 : index
    %c0_0 = arith.constant 0 : index
    %0 = vector.load %arg1[%c0, %c0_0] : memref<64x512xf32, #tpu.memory_space<vmem>>, vector<64x512xf32>
    %cst = arith.constant 5.000000e-01 : f32
    %1 = vector.broadcast %cst : f32 to vector<64x512xf32>
    %2 = arith.mulf %1, %0 : vector<64x512xf32>
    %3 = math.tanh %2 : vector<64x512xf32>
    %cst_1 = arith.constant 1.000000e+00 : f32
    %4 = vector.broadcast %cst_1 : f32 to vector<64x512xf32>
    %5 = arith.addf %3, %4 : vector<64x512xf32>
    %cst_2 = arith.constant 5.000000e-01 : f32
    %6 = vector.broadcast %cst_2 : f32 to vector<64x512xf32>
    %7 = arith.mulf %6, %5 : vector<64x512xf32>
    %c0_3 = arith.constant 0 : index
    %c0_4 = arith.constant 0 : index
    %8 = vector.load %arg2[%c0_3, %c0_4] : memref<64x512xf32, #tpu.memory_space<vmem>>, vector<64x512xf32>
    tpu.vector_store %arg2[%c0_3, %c0_4], %7 {strides = array<i32>} : memref<64x512xf32, #tpu.memory_space<vmem>>, vector<64x512xf32>,
    return
  }
  func.func @transform_0(%arg0: i32) -> (i32, i32) {
    %c0_i32 = arith.constant 0 : i32
    %c0_i32_0 = arith.constant 0 : i32
    return %arg0, %c0_i32 : i32, i32
  }
  func.func @transform_1(%arg0: i32) -> (i32, i32) {
    %c0_i32 = arith.constant 0 : i32
    %c0_i32_0 = arith.constant 0 : i32
    return %arg0, %c0_i32 : i32, i32
  }
}

</mosaic_0001>

<llo_original>
// kernel: austin_forward.1
$region0: #{austin_forward.1}
  #allocation0 [shape = 'u32[]', space=smem, size = 0x4, offset = 0x4, fixed_abs, tag = 'smem constant byte address 0x4 - core index']
  #allocation1 [shape = 'u32[144,128]{1,0:T(1,128)}', space=vmem, size = 0x12000, scoped, tag = 'internal scratch']
  %s0 = inlined_call_operand.vmem [shape: f32[128,512], index: 0, kind: input, shape index: {}]
  %s1 = inlined_call_operand.vmem [shape: f32[128,512], index: 1, kind: output, shape index: {}]
  %s2 = sld [smem:[#allocation0]]
  $region37: #{austin_forward.1} parent=0
    _
  %s4 = ssub.s32 1, %s2
  %s5 = scalar_select 0, %s4, %s2
  loop: start=0, step=1, limit=4
  $region2: #{austin_forward.1} parent=0 // loop_pre_header
    _
  $region3: #{austin_forward.1} parent=0 // loop_header
    %s7 = sphi 0, %s11
    %p8 = scmp.ge.s32.totalorder %s7, 4
    %s17 = sphi 0, %s19
    %s20 = sphi 0, %s17
    %s21 = sphi 0, %s20
    %s37 = sphi 0, %s21
    %s43 = sphi 0, %s45
    %s46 = sphi 0, %s43
    %s47 = sphi 0, %s46
    %s63 = sphi 0, %s47
  $region4: #{austin_forward.1} parent=0 // loop_header_branch
    %10 = sbr.rel (%p8) target = $region8
  $region5: #{austin_forward.1} parent=0 // loop_body
    %s12 = ssub.s32 %s7, 1
    %s13 = ssub.s32 %s7, 2
    %s14 = sadd.s32 %s7, 1
    %s15 = ssub.s32 %s7, %s14
    %p16 = scmp.eq.s32.totalorder %s15, 0
    %s18 = sadd.s32 %s17, 1
    %s19 = scalar_select %p16, %s17, %s18
    %p22 = pneg %p16
    %p23 = scmp.eq.s32.totalorder %s7, 1
    %p24 = por %p22, %p23
    %p25 = scmp.ne.s32.totalorder %s17, %s20
    %p26 = scmp.eq.s32.totalorder %s7, 0
    %p27 = por %p25, %p26
    %p28 = scmp.ne.s32.totalorder %s17, %s20
    %p29 = scmp.eq.s32.totalorder %s12, 1
    %p30 = por %p28, %p29
    %p31 = scmp.ne.s32.totalorder %s20, %s21
    %p32 = scmp.eq.s32.totalorder %s12, 0
    %p33 = por %p31, %p32
    %p34 = scmp.ne.s32.totalorder %s20, %s21
    %p35 = scmp.eq.s32.totalorder %s13, 1
    %p36 = por %p34, %p35
    %p38 = scmp.ne.s32.totalorder %s21, %s37
    %p39 = scmp.eq.s32.totalorder %s13, 0
    %p40 = por %p38, %p39
    %s41 = ssub.s32 %s7, %s14
    %p42 = scmp.eq.s32.totalorder %s41, 0
    %s44 = sadd.s32 %s43, 1
    %s45 = scalar_select %p42, %s43, %s44
    %p48 = pneg %p42
    %p49 = scmp.eq.s32.totalorder %s7, 1
    %p50 = por %p48, %p49
    %p51 = scmp.ne.s32.totalorder %s43, %s46
    %p52 = scmp.eq.s32.totalorder %s7, 0
    %p53 = por %p51, %p52
    %p54 = scmp.ne.s32.totalorder %s43, %s46
    %p55 = scmp.eq.s32.totalorder %s12, 1
    %p56 = por %p54, %p55
    %p57 = scmp.ne.s32.totalorder %s46, %s47
    %p58 = scmp.eq.s32.totalorder %s12, 0
    %p59 = por %p57, %p58
    %p60 = scmp.ne.s32.totalorder %s46, %s47
    %p61 = scmp.eq.s32.totalorder %s13, 1
    %p62 = por %p60, %p61
    %p64 = scmp.ne.s32.totalorder %s47, %s63
    %p65 = scmp.eq.s32.totalorder %s13, 0
    %p66 = por %p64, %p65
    %p67 = scmp.le.s32.totalorder 1, %s7
    %p68 = scmp.lt.s32.totalorder %s7, 3
    %p69 = pnand %p67, %p68
    %p70 = pneg %p69
    // Predicated region
    $region9: #{austin_forward.1} parent=5 // pred_check
      _
    $region10: #{austin_forward.1} parent=5 // pred_check_branch
      %72 = sbr.rel (%p69) target = $region12
    $region11: #{austin_forward.1} parent=5 // pred_region
      %s73 = ssub.s32 %s7, 1
    $region12: #{austin_forward.1} parent=5 // pred_fallthru
      _
    %p74 = scmp.lt.s32.totalorder %s7, 2
    // Predicated region
    $region13: #{austin_forward.1} parent=5 // pred_check
      %p75 = pneg %p74
    $region14: #{austin_forward.1} parent=5 // pred_check_branch
      %77 = sbr.rel (%p75) target = $region16
    $region15: #{austin_forward.1} parent=5 // pred_region
      // Predicated region
      $region17: #{austin_forward.1} parent=15 // pred_check
        %p78 = pneg %p27
      $region18: #{austin_forward.1} parent=15 // pred_check_branch
        %80 = sbr.rel (%p78) target = $region20
      $region19: #{austin_forward.1} parent=15 // pred_region
        %s81 = smul.u32 8, %s7
        %p82 = scmp.lt.s32.totalorder %s81, 15
        %s83 = scalar_select %p82, %s81, 15
        %s84 = smul.addr %s83, 4
        %s85 = smul.addr %s84, 8
        %s86 = scalar_lea.vmem %s0, %s85
        %s87 = smul.u32 8, %s7
      $region20: #{austin_forward.1} parent=15 // pred_fallthru
        _
    $region16: #{austin_forward.1} parent=5 // pred_fallthru
      _
    %p88 = scmp.le.s32.totalorder 1, %s7
    %p89 = scmp.lt.s32.totalorder %s7, 3
    %p90 = pnand %p88, %p89
    %p91 = pneg %p90
    // Predicated region
    $region21: #{austin_forward.1} parent=5 // pred_check
      _
    $region22: #{austin_forward.1} parent=5 // pred_check_branch
      %93 = sbr.rel (%p90) target = $region24
    $region23: #{austin_forward.1} parent=5 // pred_region
      %s94 = ssub.s32 %s7, 1
      %s95 = smul.u32 8, %s12
      %p96 = scmp.lt.s32.totalorder %s95, 15
      %s97 = scalar_select %p96, %s95, 15
      %s98 = smul.addr %s97, 4
      %s99 = smul.addr %s98, 8
      %s100 = scalar_lea.vmem %s0, %s99
      %p101 = pneg %p33
      %p102 = pneg %p30
      %p103 = pneg %p59
      %p104 = pneg %p56
      %s105 = smul.u32 8, %s12
      %p106 = scmp.lt.s32.totalorder %s105, 15
      %s107 = scalar_select %p106, %s105, 15
      %s108 = smul.addr %s107, 4
      %s109 = smul.addr %s108, 8
      %s110 = scalar_lea.vmem %s1, %s109
      %s111 = smul.u32 8, %s12
      %p112 = scmp.lt.s32.totalorder %s111, 15
      %s113 = scalar_select %p112, %s111, 15
      %s114 = smul.addr %s113, 4
      %s115 = smul.addr %s114, 8
      %s116 = scalar_lea.vmem %s0, %s115
      %s117 = smul.u32 8, %s12
      %s118 = smul.u32 8, %s12
      %p119 = scmp.lt.s32.totalorder %s118, 15
      %s120 = scalar_select %p119, %s118, 15
      %s121 = smul.addr %s120, 4
      %s122 = smul.addr %s121, 8
      %s123 = scalar_lea.vmem %s1, %s122
      %s124 = smul.u32 8, %s12
      %v125 = vld [vmem:[%s116] sm:$0xff]
      %v126 = vld [vmem:[%s116 + $0x8] sm:$0xff]
      %v127 = vld [vmem:[%s116 + $0x10] sm:$0xff]
      %v128 = vld [vmem:[%s116 + $0x18] sm:$0xff]
      %v129 = vld [vmem:[%s116 + $0x20] sm:$0xff]
      %v130 = vld [vmem:[%s116 + $0x28] sm:$0xff]
      %v131 = vld [vmem:[%s116 + $0x30] sm:$0xff]
      %v132 = vld [vmem:[%s116 + $0x38] sm:$0xff]
      %v133 = vld [vmem:[%s116 + $0x40] sm:$0xff]
      %v134 = vld [vmem:[%s116 + $0x48] sm:$0xff]
      %v135 = vld [vmem:[%s116 + $0x50] sm:$0xff]
      %v136 = vld [vmem:[%s116 + $0x58] sm:$0xff]
      %v137 = vld [vmem:[%s116 + $0x60] sm:$0xff]
      %v138 = vld [vmem:[%s116 + $0x68] sm:$0xff]
      %v139 = vld [vmem:[%s116 + $0x70] sm:$0xff]
      %v140 = vld [vmem:[%s116 + $0x78] sm:$0xff]
      %v141 = vld [vmem:[%s116 + $0x80] sm:$0xff]
      %v142 = vld [vmem:[%s116 + $0x88] sm:$0xff]
      %v143 = vld [vmem:[%s116 + $0x90] sm:$0xff]
      %v144 = vld [vmem:[%s116 + $0x98] sm:$0xff]
      %v145 = vld [vmem:[%s116 + $0xa0] sm:$0xff]
      %v146 = vld [vmem:[%s116 + $0xa8] sm:$0xff]
      %v147 = vld [vmem:[%s116 + $0xb0] sm:$0xff]
      %v148 = vld [vmem:[%s116 + $0xb8] sm:$0xff]
      %v149 = vld [vmem:[%s116 + $0xc0] sm:$0xff]
      %v150 = vld [vmem:[%s116 + $0xc8] sm:$0xff]
      %v151 = vld [vmem:[%s116 + $0xd0] sm:$0xff]
      %v152 = vld [vmem:[%s116 + $0xd8] sm:$0xff]
      %v153 = vld [vmem:[%s116 + $0xe0] sm:$0xff]
      %v154 = vld [vmem:[%s116 + $0xe8] sm:$0xff]
      %v155 = vld [vmem:[%s116 + $0xf0] sm:$0xff]
      %v156 = vld [vmem:[%s116 + $0xf8] sm:$0xff]
      %v157 = vmul.f32 %v125, 0.5
      %v158 = vmul.f32 %v126, 0.5
      %v159 = vmul.f32 %v127, 0.5
      %v160 = vmul.f32 %v128, 0.5
      %v161 = vmul.f32 %v129, 0.5
      %v162 = vmul.f32 %v130, 0.5
      %v163 = vmul.f32 %v131, 0.5
      %v164 = vmul.f32 %v132, 0.5
      %v165 = vmul.f32 %v133, 0.5
      %v166 = vmul.f32 %v134, 0.5
      %v167 = vmul.f32 %v135, 0.5
      %v168 = vmul.f32 %v136, 0.5
      %v169 = vmul.f32 %v137, 0.5
      %v170 = vmul.f32 %v138, 0.5
      %v171 = vmul.f32 %v139, 0.5
      %v172 = vmul.f32 %v140, 0.5
      %v173 = vmul.f32 %v141, 0.5
      %v174 = vmul.f32 %v142, 0.5
      %v175 = vmul.f32 %v143, 0.5
      %v176 = vmul.f32 %v144, 0.5
      %v177 = vmul.f32 %v145, 0.5
      %v178 = vmul.f32 %v146, 0.5
      %v179 = vmul.f32 %v147, 0.5
      %v180 = vmul.f32 %v148, 0.5
      %v181 = vmul.f32 %v149, 0.5
      %v182 = vmul.f32 %v150, 0.5
      %v183 = vmul.f32 %v151, 0.5
      %v184 = vmul.f32 %v152, 0.5
      %v185 = vmul.f32 %v153, 0.5
      %v186 = vmul.f32 %v154, 0.5
      %v187 = vmul.f32 %v155, 0.5
      %v188 = vmul.f32 %v156, 0.5
      %v189 = vtanh.pop %v157
      %v190 = vtanh.pop %v158
      %v191 = vtanh.pop %v159
      %v192 = vtanh.pop %v160
      %v193 = vtanh.pop %v161
      %v194 = vtanh.pop %v162
      %v195 = vtanh.pop %v163
      %v196 = vtanh.pop %v164
      %v197 = vtanh.pop %v165
      %v198 = vtanh.pop %v166
      %v199 = vtanh.pop %v167
      %v200 = vtanh.pop %v168
      %v201 = vtanh.pop %v169
      %v202 = vtanh.pop %v170
      %v203 = vtanh.pop %v171
      %v204 = vtanh.pop %v172
      %v205 = vtanh.pop %v173
      %v206 = vtanh.pop %v174
      %v207 = vtanh.pop %v175
      %v208 = vtanh.pop %v176
      %v209 = vtanh.pop %v177
      %v210 = vtanh.pop %v178
      %v211 = vtanh.pop %v179
      %v212 = vtanh.pop %v180
      %v213 = vtanh.pop %v181
      %v214 = vtanh.pop %v182
      %v215 = vtanh.pop %v183
      %v216 = vtanh.pop %v184
      %v217 = vtanh.pop %v185
      %v218 = vtanh.pop %v186
      %v219 = vtanh.pop %v187
      %v220 = vtanh.pop %v188
      %v221 = vadd.f32 %v189, 1.0
      %v222 = vadd.f32 %v190, 1.0
      %v223 = vadd.f32 %v191, 1.0
      %v224 = vadd.f32 %v192, 1.0
      %v225 = vadd.f32 %v193, 1.0
      %v226 = vadd.f32 %v194, 1.0
      %v227 = vadd.f32 %v195, 1.0
      %v228 = vadd.f32 %v196, 1.0
      %v229 = vadd.f32 %v197, 1.0
      %v230 = vadd.f32 %v198, 1.0
      %v231 = vadd.f32 %v199, 1.0
      %v232 = vadd.f32 %v200, 1.0
      %v233 = vadd.f32 %v201, 1.0
      %v234 = vadd.f32 %v202, 1.0
      %v235 = vadd.f32 %v203, 1.0
      %v236 = vadd.f32 %v204, 1.0
      %v237 = vadd.f32 %v205, 1.0
      %v238 = vadd.f32 %v206, 1.0
      %v239 = vadd.f32 %v207, 1.0
      %v240 = vadd.f32 %v208, 1.0
      %v241 = vadd.f32 %v209, 1.0
      %v242 = vadd.f32 %v210, 1.0
      %v243 = vadd.f32 %v211, 1.0
      %v244 = vadd.f32 %v212, 1.0
      %v245 = vadd.f32 %v213, 1.0
      %v246 = vadd.f32 %v214, 1.0
      %v247 = vadd.f32 %v215, 1.0
      %v248 = vadd.f32 %v216, 1.0
      %v249 = vadd.f32 %v217, 1.0
      %v250 = vadd.f32 %v218, 1.0
      %v251 = vadd.f32 %v219, 1.0
      %v252 = vadd.f32 %v220, 1.0
      %v253 = vmul.f32 %v221, 0.5
      %v254 = vmul.f32 %v222, 0.5
      %v255 = vmul.f32 %v223, 0.5
      %v256 = vmul.f32 %v224, 0.5
      %v257 = vmul.f32 %v225, 0.5
      %v258 = vmul.f32 %v226, 0.5
      %v259 = vmul.f32 %v227, 0.5
      %v260 = vmul.f32 %v228, 0.5
      %v261 = vmul.f32 %v229, 0.5
      %v262 = vmul.f32 %v230, 0.5
      %v263 = vmul.f32 %v231, 0.5
      %v264 = vmul.f32 %v232, 0.5
      %v265 = vmul.f32 %v233, 0.5
      %v266 = vmul.f32 %v234, 0.5
      %v267 = vmul.f32 %v235, 0.5
      %v268 = vmul.f32 %v236, 0.5
      %v269 = vmul.f32 %v237, 0.5
      %v270 = vmul.f32 %v238, 0.5
      %v271 = vmul.f32 %v239, 0.5
      %v272 = vmul.f32 %v240, 0.5
      %v273 = vmul.f32 %v241, 0.5
      %v274 = vmul.f32 %v242, 0.5
      %v275 = vmul.f32 %v243, 0.5
      %v276 = vmul.f32 %v244, 0.5
      %v277 = vmul.f32 %v245, 0.5
      %v278 = vmul.f32 %v246, 0.5
      %v279 = vmul.f32 %v247, 0.5
      %v280 = vmul.f32 %v248, 0.5
      %v281 = vmul.f32 %v249, 0.5
      %v282 = vmul.f32 %v250, 0.5
      %v283 = vmul.f32 %v251, 0.5
      %v284 = vmul.f32 %v252, 0.5
      %285 = vst [vmem:[%s123] sm:$0xff] %v253
      %286 = vst [vmem:[%s123 + $0x8] sm:$0xff] %v254
      %287 = vst [vmem:[%s123 + $0x10] sm:$0xff] %v255
      %288 = vst [vmem:[%s123 + $0x18] sm:$0xff] %v256
      %289 = vst [vmem:[%s123 + $0x20] sm:$0xff] %v257
      %290 = vst [vmem:[%s123 + $0x28] sm:$0xff] %v258
      %291 = vst [vmem:[%s123 + $0x30] sm:$0xff] %v259
      %292 = vst [vmem:[%s123 + $0x38] sm:$0xff] %v260
      %293 = vst [vmem:[%s123 + $0x40] sm:$0xff] %v261
      %294 = vst [vmem:[%s123 + $0x48] sm:$0xff] %v262
      %295 = vst [vmem:[%s123 + $0x50] sm:$0xff] %v263
      %296 = vst [vmem:[%s123 + $0x58] sm:$0xff] %v264
      %297 = vst [vmem:[%s123 + $0x60] sm:$0xff] %v265
      %298 = vst [vmem:[%s123 + $0x68] sm:$0xff] %v266
      %299 = vst [vmem:[%s123 + $0x70] sm:$0xff] %v267
      %300 = vst [vmem:[%s123 + $0x78] sm:$0xff] %v268
      %301 = vst [vmem:[%s123 + $0x80] sm:$0xff] %v269
      %302 = vst [vmem:[%s123 + $0x88] sm:$0xff] %v270
      %303 = vst [vmem:[%s123 + $0x90] sm:$0xff] %v271
      %304 = vst [vmem:[%s123 + $0x98] sm:$0xff] %v272
      %305 = vst [vmem:[%s123 + $0xa0] sm:$0xff] %v273
      %306 = vst [vmem:[%s123 + $0xa8] sm:$0xff] %v274
      %307 = vst [vmem:[%s123 + $0xb0] sm:$0xff] %v275
      %308 = vst [vmem:[%s123 + $0xb8] sm:$0xff] %v276
      %309 = vst [vmem:[%s123 + $0xc0] sm:$0xff] %v277
      %310 = vst [vmem:[%s123 + $0xc8] sm:$0xff] %v278
      %311 = vst [vmem:[%s123 + $0xd0] sm:$0xff] %v279
      %312 = vst [vmem:[%s123 + $0xd8] sm:$0xff] %v280
      %313 = vst [vmem:[%s123 + $0xe0] sm:$0xff] %v281
      %314 = vst [vmem:[%s123 + $0xe8] sm:$0xff] %v282
      %315 = vst [vmem:[%s123 + $0xf0] sm:$0xff] %v283
      %316 = vst [vmem:[%s123 + $0xf8] sm:$0xff] %v284
      %s317 = smul.u32 8, %s12
      %p318 = scmp.lt.s32.totalorder %s317, 15
      %s319 = scalar_select %p318, %s317, 15
      %s320 = smul.addr %s319, 4
      %s321 = smul.addr %s320, 8
      %s322 = scalar_lea.vmem %s1, %s321
      // Predicated region
      $region25: #{austin_forward.1} parent=23 // pred_check
        %p323 = pneg %p56
      $region26: #{austin_forward.1} parent=23 // pred_check_branch
        %325 = sbr.rel (%p323) target = $region28
      $region27: #{austin_forward.1} parent=23 // pred_region
        %s326 = smul.u32 8, %s12
      $region28: #{austin_forward.1} parent=23 // pred_fallthru
        _
    $region24: #{austin_forward.1} parent=5 // pred_fallthru
      _
    %p327 = scmp.le.s32.totalorder 2, %s7
    // Predicated region
    $region29: #{austin_forward.1} parent=5 // pred_check
      %p328 = pneg %p327
    $region30: #{austin_forward.1} parent=5 // pred_check_branch
      %330 = sbr.rel (%p328) target = $region32
    $region31: #{austin_forward.1} parent=5 // pred_region
      %s331 = ssub.s32 %s7, 2
      // Predicated region
      $region33: #{austin_forward.1} parent=31 // pred_check
        %p332 = pneg %p62
      $region34: #{austin_forward.1} parent=31 // pred_check_branch
        %334 = sbr.rel (%p332) target = $region36
      $region35: #{austin_forward.1} parent=31 // pred_region
        %s335 = smul.u32 8, %s13
        %p336 = scmp.lt.s32.totalorder %s335, 15
        %s337 = scalar_select %p336, %s335, 15
        %s338 = smul.addr %s337, 4
        %s339 = smul.addr %s338, 8
        %s340 = scalar_lea.vmem %s1, %s339
      $region36: #{austin_forward.1} parent=31 // pred_fallthru
        _
    $region32: #{austin_forward.1} parent=5 // pred_fallthru
      _
  $region6: #{austin_forward.1} parent=0 // loop_footer
    %s11 = sadd.s32 1, %s7
  $region7: #{austin_forward.1} parent=0 // loop_footer_branch
    %6 = sbr.rel target = $region3
  $region8: #{austin_forward.1} parent=0 // loop_exit
    _

</llo_original>
